<compile_context>
chip_gen: v6e
topology: v6e:2x2x1
jax: 0.10.0
libtpu: 0.0.40
codegen_flags: <defaults>
</compile_context>

<pallas_src>
import functools
import math

import jax
import jax.numpy as jnp
import numpy as np
from jax.experimental import pallas as pl
from jax.experimental.pallas import tpu as pltpu


# ----------------------------------------------------------------------------
# PE table (exactly reproduces the PyTorch __init__ loop, including its
# non-standard cos exponent 2*(i+1)/embedding_dim).
# ----------------------------------------------------------------------------
def build_pe_table(embedding_dim: int, max_seq_len: int = 200) -> jnp.ndarray:
    assert embedding_dim % 2 == 0, "PositionalEncoder requires an even embedding_dim"
    pe = np.zeros((max_seq_len, embedding_dim), dtype=np.float32)
    for pos in range(max_seq_len):
        for i in range(0, embedding_dim, 2):
            pe[pos, i] = math.sin(pos / 10000 ** (2 * i / embedding_dim))
            pe[pos, i + 1] = math.cos(pos / 10000 ** (2 * (i + 1) / embedding_dim))
    return jnp.asarray(pe)


# ----------------------------------------------------------------------------
# Kernel body: pure VPU elementwise; pe broadcasts over leading/size-1 dims.
# ----------------------------------------------------------------------------
def _pe_add_kernel(x_ref, pe_ref, o_ref, *, scale):
    o_ref[...] = x_ref[...] * scale + pe_ref[...]


# ----------------------------------------------------------------------------
# Sizing helpers.
# ----------------------------------------------------------------------------
def _cdiv(a, b):
    return (a + b - 1) // b


def _round_up(a, m):
    return _cdiv(a, m) * m


def _sublane_quantum(itemsize: int) -> int:
    # f32 -> 8, bf16 -> 16, int8/fp8 -> 32 (packed-sublane layout quantum).
    return max(8, 32 // itemsize)


def _vmem_budget():
    """Generation-aware (block_bytes, vmem_limit_bytes)."""
    try:
        cap = getattr(pltpu.get_tpu_info(), "vmem_capacity_bytes", None)
    except Exception:  # pragma: no cover - query not available
        cap = None
    if cap is None:
        cap = 64 * 1024 * 1024  # conservative fallback (v7x-sized VMEM)
    if cap <= 64 * 1024 * 1024:
        # v7x-class: 3.2 TB/s HBM makes the ~0.35us/step overhead a 15-20% tax
        # at 2 MiB blocks, so use 6 MiB blocks; physical VMEM is only 64 MiB,
        # so cap the scoped limit at 48 MiB (3 ops x 2 bufs x 6 MiB = 36 MiB).
        return 6 * 1024 * 1024, 48 * 1024 * 1024
    # v5e / v6e (128 MiB VMEM): 4 MiB blocks x 3 ops x 2 bufs = 24 MiB; set an
    # explicit 40 MiB limit so we are not silently capped at the 16/32 MiB
    # scoped-VMEM defaults.
    return 4 * 1024 * 1024, 40 * 1024 * 1024


def _cost(batch, seq_len, dim, itemsize):
    n = batch * seq_len * dim
    return pl.CostEstimate(
        flops=2 * n,
        transcendentals=0,
        bytes_accessed=(2 * n + seq_len * dim) * itemsize,
    )


# ----------------------------------------------------------------------------
# Lane-aligned path: dim % 128 == 0, 3-D blocks (tb, ts, dim).
# ----------------------------------------------------------------------------
def _tiled_path(x, pe, scale, donate_x):
    batch, seq_len, dim = x.shape
    itemsize = x.dtype.itemsize
    block_bytes, vmem_limit = _vmem_budget()
    quantum = _sublane_quantum(itemsize)

    seq_bytes = seq_len * dim * itemsize
    if seq_bytes <= block_bytes:
        ts = seq_len
        tb = min(batch, max(1, block_bytes // seq_bytes))
    else:
        tb = 1
        ts = max(quantum, (block_bytes // (dim * itemsize) // quantum) * quantum)
        ts = min(ts, seq_len)

    # v7x has 2 TensorCores: a 1-step grid leaves one idle.  Split the cheapest
    # axis (batch block dim is leading, so it has no (8,128) constraint).
    if _cdiv(seq_len, ts) * _cdiv(batch, tb) == 1:
        if batch >= 2:
            tb = _cdiv(batch, 2)
        elif seq_len >= 2 * quantum:
            ts = min(seq_len, _round_up(_cdiv(seq_len, 2), quantum))

    num_s = _cdiv(seq_len, ts)
    num_b = _cdiv(batch, tb)

    kernel = functools.partial(_pe_add_kernel, scale=scale)
    return pl.pallas_call(
        kernel,
        out_shape=jax.ShapeDtypeStruct((batch, seq_len, dim), x.dtype),
        grid_spec=pltpu.PrefetchScalarGridSpec(
            num_scalar_prefetch=0,
            # seq tiles OUTER, batch tiles INNER: pe's block index only changes
            # on the outer axis, so the table is not re-DMAed per batch tile.
            grid=(num_s, num_b),
            in_specs=[
                pl.BlockSpec((tb, ts, dim), lambda s, b: (b, s, 0)),
                pl.BlockSpec((ts, dim), lambda s, b: (s, 0)),
            ],
            out_specs=pl.BlockSpec((tb, ts, dim), lambda s, b: (b, s, 0)),
        ),
        compiler_params=pltpu.CompilerParams(
            dimension_semantics=("parallel", "parallel"),
            vmem_limit_bytes=vmem_limit,
        ),
        cost_estimate=_cost(batch, seq_len, dim, itemsize),
        input_output_aliases=({0: 0} if donate_x else {}),
    )(x, pe)


# ----------------------------------------------------------------------------
# Lane-dense path: dim % 128 != 0, flatten (seq, dim) into the lane axis so
# stores are full 128-lane vst.  Tiles over both batch and the flat axis.
# ----------------------------------------------------------------------------
def _flat_path(x, pe, scale, donate_x):
    batch, seq_len, dim = x.shape
    itemsize = x.dtype.itemsize
    block_bytes, vmem_limit = _vmem_budget()
    quantum = _sublane_quantum(itemsize)

    flat = seq_len * dim
    x2 = x.reshape(batch, flat)      # contiguous -> metadata-only reshape
    pe2 = pe.reshape(1, flat)

    row_bytes = flat * itemsize
    rows_per_block = max(1, block_bytes // row_bytes)
    if rows_per_block >= batch:
        tb, tf = batch, flat
    elif rows_per_block >= quantum:
        tb, tf = (rows_per_block // quantum) * quantum, flat
    else:
        # Rows too big for a quantum-aligned row group: tile the flat lane axis
        # in 128-lane multiples (pe uses the same flat index map, so alignment
        # between x and pe inside every block is preserved).
        tb = min(batch, quantum)
        tf = max(128, (block_bytes // (tb * itemsize) // 128) * 128)
        tf = min(tf, flat)

    # v7x megacore: guarantee >= 2 grid steps when there is work to split.
    if _cdiv(flat, tf) * _cdiv(batch, tb) == 1:
        if flat >= 256:
            tf = _round_up(_cdiv(flat, 2), 128)
        elif batch >= 2 * quantum:
            tb = _round_up(_cdiv(batch, 2), quantum)

    num_f = _cdiv(flat, tf)
    num_b = _cdiv(batch, tb)

    kernel = functools.partial(_pe_add_kernel, scale=scale)
    out = pl.pallas_call(
        kernel,
        out_shape=jax.ShapeDtypeStruct((batch, flat), x.dtype),
        grid_spec=pltpu.PrefetchScalarGridSpec(
            num_scalar_prefetch=0,
            # flat tiles OUTER, batch tiles INNER (pe re-fetched once per flat
            # tile only, not per batch tile).
            grid=(num_f, num_b),
            in_specs=[
                pl.BlockSpec((tb, tf), lambda f, b: (b, f)),
                pl.BlockSpec((1, tf), lambda f, b: (0, f)),   # sublane-broadcast
            ],
            out_specs=pl.BlockSpec((tb, tf), lambda f, b: (b, f)),
        ),
        compiler_params=pltpu.CompilerParams(
            dimension_semantics=("parallel", "parallel"),
            vmem_limit_bytes=vmem_limit,
        ),
        cost_estimate=_cost(batch, seq_len, dim, itemsize),
        input_output_aliases=({0: 0} if donate_x else {}),
    )(x2, pe2)
    return out.reshape(batch, seq_len, dim)


# ----------------------------------------------------------------------------
# Public wrapper (the nn.Module forward).
# ----------------------------------------------------------------------------
def positional_encoder(x: jnp.ndarray, pe_full: jnp.ndarray,
                       donate_x: bool = False) -> jnp.ndarray:
    """x: [batch, seq, dim]; pe_full: [max_seq_len, dim] (buffer from __init__)."""
    batch, seq_len, dim = x.shape
    max_seq_len, pe_dim = pe_full.shape
    assert pe_dim == dim, "embedding_dim mismatch between x and pe table"
    assert seq_len <= max_seq_len, (
        f"seq_len={seq_len} exceeds max_seq_len={max_seq_len}"
    )

    # Matches self.pe[:seq_len]; cast to x.dtype (for low-precision inputs this
    # adds in x's dtype instead of fp32 -- same as the output dtype either way).
    pe = pe_full[:seq_len].astype(x.dtype)
    scale = math.sqrt(dim)

    if dim % 128 == 0:
        return _tiled_path(x, pe, scale, donate_x)
    return _flat_path(x, pe, scale, donate_x)


if __name__ == "__main__":
    key = jax.random.PRNGKey(0)

    # --- Case 1: small embedding (lane-dense flattened path) ---
    batch, seq_len, embedding_dim = 2, 8, 32
    x1 = jax.random.normal(key, (batch, seq_len, embedding_dim), dtype=jnp.float32)
    pe1 = build_pe_table(embedding_dim, max_seq_len=200)
    out1 = jax.block_until_ready(positional_encoder(x1, pe1))
    ref1 = x1 * math.sqrt(embedding_dim) + pe1[:seq_len][None, :, :]
    np.testing.assert_allclose(np.asarray(out1), np.asarray(ref1), rtol=1e-6, atol=1e-6)

    # --- Case 2: lane-aligned embedding (3-D tiled path) ---
    batch2, seq_len2, embedding_dim2 = 2, 16, 256
    key2 = jax.random.PRNGKey(1)
    x2 = jax.random.normal(key2, (batch2, seq_len2, embedding_dim2), dtype=jnp.float32)
    pe2 = build_pe_table(embedding_dim2, max_seq_len=200)
    out2 = jax.block_until_ready(positional_encoder(x2, pe2))
    ref2 = x2 * math.sqrt(embedding_dim2) + pe2[:seq_len2][None, :, :]
    np.testing.assert_allclose(np.asarray(out2), np.asarray(ref2), rtol=1e-6, atol=1e-6)

    print("KERNEL_OK")
</pallas_src>

<mosaic_0001>
module attributes {stable_mosaic.version = 11 : i64} {
  func.func @_pe_add_kernel(%arg0: i32, %arg1: i32, %arg2: memref<2x128xf32, #tpu.memory_space<vmem>>, %arg3: memref<1x128xf32, #tpu.memory_space<vmem>>, %arg4: memref<2x128xf32, #tpu.memory_space<vmem>>) attributes {dimension_semantics = [#tpu.dimension_semantics<parallel>, #tpu.dimension_semantics<parallel>], iteration_bounds = array<i64: 2, 1>, scalar_prefetch = 0 : i64, scratch_operands = 0 : i64, tpu.core_type = #tpu.core_type<tc>, window_params = [{transform_indices = @transform_0, window_bounds = array<i64: 2, 128>}, {transform_indices = @transform_1, window_bounds = array<i64: 1, 128>}, {transform_indices = @transform_2, window_bounds = array<i64: 2, 128>}]} {
    %c0 = arith.constant 0 : index
    %c0_0 = arith.constant 0 : index
    %0 = vector.load %arg2[%c0, %c0_0] : memref<2x128xf32, #tpu.memory_space<vmem>>, vector<2x128xf32>
    %cst = arith.constant 5.65685415 : f32
    %1 = vector.broadcast %cst : f32 to vector<2x128xf32>
    %2 = arith.mulf %0, %1 : vector<2x128xf32>
    %c0_1 = arith.constant 0 : index
    %c0_2 = arith.constant 0 : index
    %3 = vector.load %arg3[%c0_1, %c0_2] : memref<1x128xf32, #tpu.memory_space<vmem>>, vector<1x128xf32>
    %4 = vector.broadcast %3 : vector<1x128xf32> to vector<2x128xf32>
    %5 = arith.addf %2, %4 : vector<2x128xf32>
    %c0_3 = arith.constant 0 : index
    %c0_4 = arith.constant 0 : index
    %6 = vector.load %arg4[%c0_3, %c0_4] : memref<2x128xf32, #tpu.memory_space<vmem>>, vector<2x128xf32>
    tpu.vector_store %arg4[%c0_3, %c0_4], %5 {strides = array<i32>} : memref<2x128xf32, #tpu.memory_space<vmem>>, vector<2x128xf32>,
    return
  }
  func.func @transform_0(%arg0: i32, %arg1: i32) -> (i32, i32) {
    %c0_i32 = arith.constant 0 : i32
    return %arg1, %arg0 : i32, i32
  }
  func.func @transform_1(%arg0: i32, %arg1: i32) -> (i32, i32) {
    %c0_i32 = arith.constant 0 : i32
    %c0_i32_0 = arith.constant 0 : i32
    return %c0_i32, %arg0 : i32, i32
  }
  func.func @transform_2(%arg0: i32, %arg1: i32) -> (i32, i32) {
    %c0_i32 = arith.constant 0 : i32
    return %arg1, %arg0 : i32, i32
  }
}

</mosaic_0001>

<llo_original>
// kernel: tpu_custom_call.1
$region0: #{tpu_custom_call.1}
  #allocation0 [shape = 'u32[]', space=smem, size = 0x4, offset = 0x4, fixed_abs, tag = 'smem constant byte address 0x4 - core index']
  #allocation1 [shape = 'u32[144,128]{1,0:T(1,128)}', space=vmem, size = 0x12000, scoped, tag = 'internal scratch']
  %s0 = inlined_call_operand.hbm [shape: f32[2,256], index: 0, kind: input, shape index: {}]
  %s1 = inlined_call_operand.hbm [shape: f32[1,256], index: 1, kind: input, shape index: {}]
  %s2 = inlined_call_operand.hbm [shape: f32[2,256], index: 2, kind: output, shape index: {}]
  %s3 = sld [smem:[#allocation0]]
  $region49: #{tpu_custom_call.1} parent=0
    _
  %s5 = ssub.s32 1, %s3
  %s6 = scalar_select 0, %s5, %s3
  $region1: #{tpu_custom_call.1} parent=0
    #allocation2 [shape = 'u8[2048]{0}', space=vmem, size = 0x800, scoped, tag = 'input window, operand 0']
    #allocation3 [shape = 's32[2]{0}', space=sflag, size = 0x8, scoped, tag = 'scoped memory for tpu_custom_call.1']
    #allocation4 [shape = 's32[2]{0}', space=sflag, size = 0x8, scoped, tag = 'scoped memory for tpu_custom_call.1']
    #allocation5 [shape = 'u8[1024]{0}', space=vmem, size = 0x400, scoped, tag = 'input window, operand 1']
    #allocation6 [shape = 's32[2]{0}', space=sflag, size = 0x8, scoped, tag = 'scoped memory for tpu_custom_call.1']
    #allocation7 [shape = 'u8[2048]{0}', space=vmem, size = 0x800, scoped, tag = 'output window, operand 0']
    %7 = vsyncpa [#allocation3], 0
    %s8 = scalar_lea.sflag [#allocation3], 1
    %9 = vsyncpa %s8, 0
    %10 = vsyncpa [#allocation6], 0
    %s11 = scalar_lea.sflag [#allocation6], 1
    %12 = vsyncpa %s11, 0
    %13 = vsyncpa [#allocation4], 0
    %s14 = scalar_lea.sflag [#allocation4], 1
    %15 = vsyncpa %s14, 0
    loop: start=0, step=1, limit=4
    $region2: #{tpu_custom_call.1} parent=1 // loop_pre_header
      _
    $region3: #{tpu_custom_call.1} parent=1 // loop_header
      %s17 = sphi 0, %s21
      %p18 = scmp.ge.s32.totalorder %s17, 4
      %s24 = sphi 0, %s36
      %s25 = sphi 0, %s32
      %s26 = sphi 0, %s24
      %s27 = sphi 0, %s25
      %s28 = sphi 0, %s26
      %s29 = sphi 0, %s27
      %s41 = sphi 0, %s43
      %s44 = sphi 0, %s41
      %s45 = sphi 0, %s44
      %s61 = sphi 0, %s45
      %s67 = sphi 0, %s69
      %s70 = sphi 0, %s67
      %s71 = sphi 0, %s70
      %s87 = sphi 0, %s71
      %s95 = sphi 0, %s97
      %s98 = sphi 0, %s95
      %s99 = sphi 0, %s98
      %s115 = sphi 0, %s99
    $region4: #{tpu_custom_call.1} parent=1 // loop_header_branch
      %20 = sbr.rel (%p18) target = $region8
    $region5: #{tpu_custom_call.1} parent=1 // loop_body
      %s22 = ssub.s32 %s17, 1
      %s23 = ssub.s32 %s17, 2
      %s30 = sadd.s32 1, %s25
      %p31 = scmp.ge.s32.totalorder %s30, 1
      %s32 = scalar_select %p31, 0, %s30
      %s33 = sadd.s32 1, %s24
      %s34 = scalar_select %p31, %s33, %s24
      %p35 = scmp.ge.s32.totalorder %s34, 2
      %s36 = scalar_select %p35, 0, %s34
      %s37 = ssub.s32 %s25, %s32
      %s38 = ssub.s32 %s24, %s36
      %s39 = sor.u32 %s37, %s38
      %p40 = scmp.eq.s32.totalorder %s39, 0
      %s42 = sadd.s32 %s41, 1
      %s43 = scalar_select %p40, %s41, %s42
      %p46 = pneg %p40
      %p47 = scmp.eq.s32.totalorder %s17, 1
      %p48 = por %p46, %p47
      %p49 = scmp.ne.s32.totalorder %s41, %s44
      %p50 = scmp.eq.s32.totalorder %s17, 0
      %p51 = por %p49, %p50
      %p52 = scmp.ne.s32.totalorder %s41, %s44
      %p53 = scmp.eq.s32.totalorder %s22, 1
      %p54 = por %p52, %p53
      %p55 = scmp.ne.s32.totalorder %s44, %s45
      %p56 = scmp.eq.s32.totalorder %s22, 0
      %p57 = por %p55, %p56
      %p58 = scmp.ne.s32.totalorder %s44, %s45
      %p59 = scmp.eq.s32.totalorder %s23, 1
      %p60 = por %p58, %p59
      %p62 = scmp.ne.s32.totalorder %s45, %s61
      %p63 = scmp.eq.s32.totalorder %s23, 0
      %p64 = por %p62, %p63
      %s65 = ssub.s32 %s24, %s36
      %p66 = scmp.eq.s32.totalorder %s65, 0
      %s68 = sadd.s32 %s67, 1
      %s69 = scalar_select %p66, %s67, %s68
      %p72 = pneg %p66
      %p73 = scmp.eq.s32.totalorder %s17, 1
      %p74 = por %p72, %p73
      %p75 = scmp.ne.s32.totalorder %s67, %s70
      %p76 = scmp.eq.s32.totalorder %s17, 0
      %p77 = por %p75, %p76
      %p78 = scmp.ne.s32.totalorder %s67, %s70
      %p79 = scmp.eq.s32.totalorder %s22, 1
      %p80 = por %p78, %p79
      %p81 = scmp.ne.s32.totalorder %s70, %s71
      %p82 = scmp.eq.s32.totalorder %s22, 0
      %p83 = por %p81, %p82
      %p84 = scmp.ne.s32.totalorder %s70, %s71
      %p85 = scmp.eq.s32.totalorder %s23, 1
      %p86 = por %p84, %p85
      %p88 = scmp.ne.s32.totalorder %s71, %s87
      %p89 = scmp.eq.s32.totalorder %s23, 0
      %p90 = por %p88, %p89
      %s91 = ssub.s32 %s25, %s32
      %s92 = ssub.s32 %s24, %s36
      %s93 = sor.u32 %s91, %s92
      %p94 = scmp.eq.s32.totalorder %s93, 0
      %s96 = sadd.s32 %s95, 1
      %s97 = scalar_select %p94, %s95, %s96
      %p100 = pneg %p94
      %p101 = scmp.eq.s32.totalorder %s17, 1
      %p102 = por %p100, %p101
      %p103 = scmp.ne.s32.totalorder %s95, %s98
      %p104 = scmp.eq.s32.totalorder %s17, 0
      %p105 = por %p103, %p104
      %p106 = scmp.ne.s32.totalorder %s95, %s98
      %p107 = scmp.eq.s32.totalorder %s22, 1
      %p108 = por %p106, %p107
      %p109 = scmp.ne.s32.totalorder %s98, %s99
      %p110 = scmp.eq.s32.totalorder %s22, 0
      %p111 = por %p109, %p110
      %p112 = scmp.ne.s32.totalorder %s98, %s99
      %p113 = scmp.eq.s32.totalorder %s23, 1
      %p114 = por %p112, %p113
      %p116 = scmp.ne.s32.totalorder %s99, %s115
      %p117 = scmp.eq.s32.totalorder %s23, 0
      %p118 = por %p116, %p117
      %p119 = scmp.le.s32.totalorder 1, %s17
      %p120 = scmp.lt.s32.totalorder %s17, 3
      %p121 = pnand %p119, %p120
      %p122 = pneg %p121
      // Predicated region
      $region9: #{tpu_custom_call.1} parent=5 // pred_check
        _
      $region10: #{tpu_custom_call.1} parent=5 // pred_check_branch
        %124 = sbr.rel (%p121) target = $region12
      $region11: #{tpu_custom_call.1} parent=5 // pred_region
        %s125 = ssub.s32 %s17, 1
      $region12: #{tpu_custom_call.1} parent=5 // pred_fallthru
        _
      %p126 = scmp.lt.s32.totalorder %s17, 2
      // Predicated region
      $region13: #{tpu_custom_call.1} parent=5 // pred_check
        %p127 = pneg %p126
      $region14: #{tpu_custom_call.1} parent=5 // pred_check_branch
        %129 = sbr.rel (%p127) target = $region16
      $region15: #{tpu_custom_call.1} parent=5 // pred_region
        // Predicated region
        $region17: #{tpu_custom_call.1} parent=15 // pred_check
          %p130 = pneg %p51
        $region18: #{tpu_custom_call.1} parent=15 // pred_check_branch
          %132 = sbr.rel (%p130) target = $region20
        $region19: #{tpu_custom_call.1} parent=15 // pred_region
          %s133 = sand.u32 %s41, 1
          %s134 = scalar_lea.sflag [#allocation3], %s133
          %s135 = sand.u32 %s41, 1
          %s136 = smul.addr %s135, 2
          %s137 = scalar_lea.vmem [#allocation2], %s136
          %s139 = ssub.s32 32, 32
          %140 = vsyncadd %s134, %s139
          %s141 = smul.addr %s25, 2
          %s142 = sadd.s32 %s24, %s141
          %s143 = smul.addr %s142, 32
          %s144 = scalar_lea.hbm %s0, %s143
          %s146 = sshll.u32 %s137, 4
          %s147 = int_to_ptr.vmem [resolvable:$true] %s146
          %149 = dma.hbm_to_vmem [thread:$0]  %s144, 32, %s147, %s134
        $region20: #{tpu_custom_call.1} parent=15 // pred_fallthru
          _
        // Predicated region
        $region21: #{tpu_custom_call.1} parent=15 // pred_check
          %p150 = pneg %p77
        $region22: #{tpu_custom_call.1} parent=15 // pred_check_branch
          %152 = sbr.rel (%p150) target = $region24
        $region23: #{tpu_custom_call.1} parent=15 // pred_region
          %s153 = sand.u32 %s67, 1
          %s154 = scalar_lea.sflag [#allocation6], %s153
          %s155 = sand.u32 %s67, 1
          %s156 = scalar_lea.vmem [#allocation5], %s155
          %s158 = ssub.s32 16, 16
          %159 = vsyncadd %s154, %s158
          %s160 = smul.addr %s24, 16
          %s161 = scalar_lea.hbm %s1, %s160
          %s163 = sshll.u32 %s156, 4
          %s164 = int_to_ptr.vmem [resolvable:$true] %s163
          %166 = dma.hbm_to_vmem [thread:$0]  %s161, 16, %s164, %s154
        $region24: #{tpu_custom_call.1} parent=15 // pred_fallthru
          _
      $region16: #{tpu_custom_call.1} parent=5 // pred_fallthru
        _
      %p167 = scmp.le.s32.totalorder 1, %s17
      %p168 = scmp.lt.s32.totalorder %s17, 3
      %p169 = pnand %p167, %p168
      %p170 = pneg %p169
      // Predicated region
      $region25: #{tpu_custom_call.1} parent=5 // pred_check
        _
      $region26: #{tpu_custom_call.1} parent=5 // pred_check_branch
        %172 = sbr.rel (%p169) target = $region28
      $region27: #{tpu_custom_call.1} parent=5 // pred_region
        %s173 = ssub.s32 %s17, 1
        %s174 = sand.u32 %s44, 1
        %s175 = scalar_lea.sflag [#allocation3], %s174
        %s176 = sand.u32 %s44, 1
        %s177 = smul.addr %s176, 2
        %s178 = scalar_lea.vmem [#allocation2], %s177
        // Predicated region
        $region29: #{tpu_custom_call.1} parent=27 // pred_check
          %p179 = pneg %p57
        $region30: #{tpu_custom_call.1} parent=27 // pred_check_branch
          %181 = sbr.rel (%p179) target = $region32
        $region31: #{tpu_custom_call.1} parent=27 // pred_region
          %182 = dma.done %s175, 32
        $region32: #{tpu_custom_call.1} parent=27 // pred_fallthru
          _
        %s183 = sand.u32 %s70, 1
        %s184 = scalar_lea.sflag [#allocation6], %s183
        %s185 = sand.u32 %s70, 1
        %s186 = scalar_lea.vmem [#allocation5], %s185
        // Predicated region
        $region33: #{tpu_custom_call.1} parent=27 // pred_check
          %p187 = pneg %p83
        $region34: #{tpu_custom_call.1} parent=27 // pred_check_branch
          %189 = sbr.rel (%p187) target = $region36
        $region35: #{tpu_custom_call.1} parent=27 // pred_region
          %190 = dma.done %s184, 16
        $region36: #{tpu_custom_call.1} parent=27 // pred_fallthru
          _
        %s191 = sand.u32 %s44, 1
        %s192 = scalar_lea.sflag [#allocation3], %s191
        %s193 = sand.u32 %s44, 1
        %s194 = smul.addr %s193, 2
        %s195 = scalar_lea.vmem [#allocation2], %s194
        %p196 = pneg %p57
        %p197 = pneg %p54
        %s198 = sand.u32 %s70, 1
        %s199 = scalar_lea.sflag [#allocation6], %s198
        %s200 = sand.u32 %s70, 1
        %s201 = scalar_lea.vmem [#allocation5], %s200
        %p202 = pneg %p83
        %p203 = pneg %p80
        %p204 = pneg %p111
        %p205 = pneg %p108
        %s206 = sand.u32 %s98, 1
        %s207 = scalar_lea.sflag [#allocation4], %s206
        %s208 = sand.u32 %s98, 1
        %s209 = smul.addr %s208, 2
        %s210 = scalar_lea.vmem [#allocation7], %s209
        %v211 = vld [vmem:[%s178] sm:$0x3]
        %v212 = vmul.f32 %v211, 5.656854
        %v213 = vld [vmem:[%s186] sm:$0x1]
        %v215 = vlaneseq
        %v216 = vshrl.u32 %v215, 7
        %v217 = vsub.s32 0, %v216
        %v218 = vrot.slane %v213, %v217
        %v220 = vadd.f32 %v212, %v218
        %221 = vst [vmem:[%s210] sm:$0x3] %v220
        %s222 = sand.u32 %s98, 1
        %s223 = scalar_lea.sflag [#allocation4], %s222
        %s224 = sand.u32 %s98, 1
        %s225 = smul.addr %s224, 2
        %s226 = scalar_lea.vmem [#allocation7], %s225
        // Predicated region
        $region37: #{tpu_custom_call.1} parent=27 // pred_check
          %p227 = pneg %p108
        $region38: #{tpu_custom_call.1} parent=27 // pred_check_branch
          %229 = sbr.rel (%p227) target = $region40
        $region39: #{tpu_custom_call.1} parent=27 // pred_region
          %s231 = ssub.s32 32, 32
          %232 = vsyncadd %s223, %s231
          %s233 = smul.addr %s27, 2
          %s234 = sadd.s32 %s26, %s233
          %s235 = smul.addr %s234, 32
          %s236 = scalar_lea.hbm %s2, %s235
          %s238 = sshll.u32 %s226, 4
          %s239 = int_to_ptr.vmem [resolvable:$true] %s238
          %241 = dma.vmem_to_hbm [thread:$0]  %s239, 32, %s236, %s223
        $region40: #{tpu_custom_call.1} parent=27 // pred_fallthru
          _
      $region28: #{tpu_custom_call.1} parent=5 // pred_fallthru
        _
      %p242 = scmp.le.s32.totalorder 2, %s17
      // Predicated region
      $region41: #{tpu_custom_call.1} parent=5 // pred_check
        %p243 = pneg %p242
      $region42: #{tpu_custom_call.1} parent=5 // pred_check_branch
        %245 = sbr.rel (%p243) target = $region44
      $region43: #{tpu_custom_call.1} parent=5 // pred_region
        %s246 = ssub.s32 %s17, 2
        // Predicated region
        $region45: #{tpu_custom_call.1} parent=43 // pred_check
          %p247 = pneg %p114
        $region46: #{tpu_custom_call.1} parent=43 // pred_check_branch
          %249 = sbr.rel (%p247) target = $region48
        $region47: #{tpu_custom_call.1} parent=43 // pred_region
          %s250 = sand.u32 %s99, 1
          %s251 = scalar_lea.sflag [#allocation4], %s250
          %s252 = sand.u32 %s99, 1
          %s253 = smul.addr %s252, 2
          %s254 = scalar_lea.vmem [#allocation7], %s253
          %255 = dma.done %s251, 32
        $region48: #{tpu_custom_call.1} parent=43 // pred_fallthru
          _
      $region44: #{tpu_custom_call.1} parent=5 // pred_fallthru
        _
    $region6: #{tpu_custom_call.1} parent=1 // loop_footer
      %s21 = sadd.s32 1, %s17
    $region7: #{tpu_custom_call.1} parent=1 // loop_footer_branch
      %16 = sbr.rel target = $region3
    $region8: #{tpu_custom_call.1} parent=1 // loop_exit
      _
    %256 = vsyncpa [#allocation3], 1
    %s257 = scalar_lea.sflag [#allocation3], 1
    %258 = vsyncpa %s257, 1
    %259 = vsyncpa [#allocation6], 1
    %s260 = scalar_lea.sflag [#allocation6], 1
    %261 = vsyncpa %s260, 1
    %262 = vsyncpa [#allocation4], 1
    %s263 = scalar_lea.sflag [#allocation4], 1
    %264 = vsyncpa %s263, 1

</llo_original>
